<compile_context>
chip_gen: v7x
topology: tpu7x:2x2x1
jax: 0.10.0
libtpu: 0.0.40
codegen_flags: <defaults>
</compile_context>

<pallas_src>
import jax
import jax.numpy as jnp
from jax.experimental import pallas as pl
from jax.experimental.pallas import tpu as pltpu

N_FEATURES_IN = 1
N_NEURONS = 100
N_OUTPUTS = 1

LANE = 128        # batch samples per sub-tile (one lane-width row)
HIDDEN = 128      # hidden dim padded 100 -> 128 (full (8,128)-aligned tile)
MAX_GROUP = 8     # max sub-tiles of 128 samples processed per grid step


def mlp_kernel(x_ref, w1_ref, b1_ref, w2_ref, b2_ref, w3_ref, b3_ref, o_ref):
    """Batch-on-lanes MLP forward.

    x_ref : (G, LANE)        f32   G rows of 128 batch samples
    w1_ref: (HIDDEN, LANE)   f32   layer-1 weight column, pre-broadcast on lanes
    b1_ref: (HIDDEN, LANE)   f32   layer-1 bias, pre-broadcast on lanes
    w2_ref: (HIDDEN, HIDDEN) bf16  PyTorch (out, in) orientation
    b2_ref: (HIDDEN, LANE)   f32   layer-2 bias, pre-broadcast on lanes
    w3_ref: (1, HIDDEN)      bf16
    b3_ref: (1, LANE)        f32
    o_ref : (G, LANE)        f32   one lane-dense output row per sub-tile
    """
    G = x_ref.shape[0]
    w2 = w2_ref[...]
    w3 = w3_ref[...]
    b2 = b2_ref[...]
    # Static unrolled loop over the G sub-tiles: per-iteration live state is a
    # single (HIDDEN, LANE) activation and all ref slices use static offsets.
    for g in range(G):
        x_row = x_ref[pl.ds(g, 1), :]                                  # (1, LANE)
        # Layer 1 (in_features == 1): VPU outer product, no MXU push,
        # no lane broadcast (done once in the wrapper).
        h = jnp.maximum(w1_ref[...] * x_row + b1_ref[...], 0.0)       # (HIDDEN, LANE) f32
        # Layer 2: transposed matmul H2 = relu(W2 @ H1 + b2) on the MXU.
        h = jnp.dot(w2, h.astype(w2.dtype),
                    preferred_element_type=jnp.float32)
        h = jnp.maximum(h + b2, 0.0)                                   # (HIDDEN, LANE) f32
        # Output layer: single real output row, (1,HIDDEN) @ (HIDDEN,LANE).
        out_row = jnp.dot(w3, h.astype(w3.dtype),
                          preferred_element_type=jnp.float32)          # (1, LANE)
        o_ref[pl.ds(g, 1), :] = (out_row + b3_ref[...]).astype(o_ref.dtype)


def _pad_params(params, use_bf16):
    """Pad hidden 100->128, keep PyTorch (out,in) orientation, pre-broadcast
    the VPU-side params over the lane (batch) axis."""
    hp = HIDDEN - N_NEURONS
    mat_dt = jnp.bfloat16 if use_bf16 else jnp.float32

    w1 = jnp.pad(params["w1"], ((0, hp), (0, 0)))                      # (128, 1)
    b1 = jnp.pad(params["b1"].reshape(-1, 1), ((0, hp), (0, 0)))       # (128, 1)
    w2 = jnp.pad(params["w2"], ((0, hp), (0, hp)))                     # (128, 128)
    b2 = jnp.pad(params["b2"].reshape(-1, 1), ((0, hp), (0, 0)))       # (128, 1)
    w3 = jnp.pad(params["w3"], ((0, 0), (0, hp)))                      # (1, 128)
    b3 = params["b3"].reshape(1, 1)                                    # (1, 1)

    w1f = jnp.broadcast_to(w1, (HIDDEN, LANE)).astype(jnp.float32)
    b1f = jnp.broadcast_to(b1, (HIDDEN, LANE)).astype(jnp.float32)
    b2f = jnp.broadcast_to(b2, (HIDDEN, LANE)).astype(jnp.float32)
    b3f = jnp.broadcast_to(b3, (1, LANE)).astype(jnp.float32)
    return w1f, b1f, w2.astype(mat_dt), b2f, w3.astype(mat_dt), b3f


def net_forward(x, params, use_bf16=True):
    """x: (B, 1) float32. params: PyTorch-orientation weights/biases."""
    B = x.shape[0]
    num_tiles = int(pl.cdiv(B, LANE))
    # Group G sub-tiles per grid step to amortize per-step overhead, keeping
    # >= 2 grid steps when the batch allows it (v7x has 2 TensorCores).
    G = max(1, min(MAX_GROUP, num_tiles // 2)) if num_tiles >= 2 else 1
    num_groups = int(pl.cdiv(num_tiles, G))
    b_pad = num_groups * G * LANE

    x_flat = jnp.pad(x.reshape(-1), (0, b_pad - B))
    x_p = x_flat.reshape(num_groups, G, LANE)

    w1f, b1f, w2, b2f, w3, b3f = _pad_params(params, use_bf16)

    def full_spec(arr):
        # Grid-invariant whole-array block (tiny; stays resident in VMEM).
        return pl.BlockSpec(arr.shape, lambda i: (0,) * arr.ndim)

    out = pl.pallas_call(
        mlp_kernel,
        out_shape=jax.ShapeDtypeStruct((num_groups, G, LANE), jnp.float32),
        grid_spec=pltpu.PrefetchScalarGridSpec(
            num_scalar_prefetch=0,
            grid=(num_groups,),
            in_specs=[
                pl.BlockSpec((None, G, LANE), lambda i: (i, 0, 0)),
                full_spec(w1f), full_spec(b1f), full_spec(w2),
                full_spec(b2f), full_spec(w3), full_spec(b3f),
            ],
            out_specs=pl.BlockSpec((None, G, LANE), lambda i: (i, 0, 0)),
        ),
        compiler_params=pltpu.CompilerParams(
            dimension_semantics=("parallel",),
        ),
    )(x_p, w1f, b1f, w2, b2f, w3, b3f)

    # Strip batch padding; sample index = group*G*128 + subtile*128 + lane.
    return out.reshape(-1)[:B].reshape(B, N_OUTPUTS)


def init_params(key):
    """Deterministic synthetic init matching the PyTorch module's shapes
    (Linear(in, out): weight (out, in), bias (out,))."""
    k1, k2, k3, k4, k5, k6 = jax.random.split(key, 6)
    scale = 0.1
    return {
        "w1": scale * jax.random.normal(k1, (N_NEURONS, N_FEATURES_IN), jnp.float32),
        "b1": scale * jax.random.normal(k2, (N_NEURONS,), jnp.float32),
        "w2": scale * jax.random.normal(k3, (N_NEURONS, N_NEURONS), jnp.float32),
        "b2": scale * jax.random.normal(k4, (N_NEURONS,), jnp.float32),
        "w3": scale * jax.random.normal(k5, (N_OUTPUTS, N_NEURONS), jnp.float32),
        "b3": scale * jax.random.normal(k6, (N_OUTPUTS,), jnp.float32),
    }


def net_forward_ref(x, p):
    h = jnp.maximum(x @ p["w1"].T + p["b1"], 0.0)
    h = jnp.maximum(h @ p["w2"].T + p["b2"], 0.0)
    return h @ p["w3"].T + p["b3"]


if __name__ == "__main__":
    key = jax.random.PRNGKey(0)
    kx, kp = jax.random.split(key)
    params = init_params(kp)

    # B=200 exercises batch padding with G=1; B=2000 exercises the grouped
    # path (G=8, 2 grid steps) plus padding.  Both are checked vs a pure-JAX
    # reference (bf16 MXU operands -> loose tolerance).
    for B in (200, 2000):
        x = jax.random.normal(jax.random.fold_in(kx, B),
                              (B, N_FEATURES_IN), jnp.float32)
        out = jax.block_until_ready(net_forward(x, params, use_bf16=True))
        ref = net_forward_ref(x, params)
        assert out.shape == (B, N_OUTPUTS)
        assert jnp.allclose(out, ref, atol=2e-2, rtol=2e-2), \
            f"mismatch vs JAX reference at B={B}"

    print("KERNEL_OK")
</pallas_src>

<mosaic_0001>
module attributes {stable_mosaic.version = 11 : i64} {
  func.func @mlp_kernel(%arg0: i32, %arg1: memref<1x1x128xf32, #tpu.memory_space<vmem>>, %arg2: memref<128x128xf32, #tpu.memory_space<vmem>>, %arg3: memref<128x128xf32, #tpu.memory_space<vmem>>, %arg4: memref<128x128xbf16, #tpu.memory_space<vmem>>, %arg5: memref<128x128xf32, #tpu.memory_space<vmem>>, %arg6: memref<1x128xbf16, #tpu.memory_space<vmem>>, %arg7: memref<1x128xf32, #tpu.memory_space<vmem>>, %arg8: memref<1x1x128xf32, #tpu.memory_space<vmem>>) attributes {dimension_semantics = [#tpu.dimension_semantics<parallel>], iteration_bounds = array<i64: 2>, scalar_prefetch = 0 : i64, scratch_operands = 0 : i64, tpu.core_type = #tpu.core_type<tc>, window_params = [{transform_indices = @transform_0, window_bounds = array<i64: 1, 1, 128>}, {pipeline_mode = #tpu.pipeline_mode<synchronous>, transform_indices = @transform_1, window_bounds = array<i64: 128, 128>}, {pipeline_mode = #tpu.pipeline_mode<synchronous>, transform_indices = @transform_2, window_bounds = array<i64: 128, 128>}, {pipeline_mode = #tpu.pipeline_mode<synchronous>, transform_indices = @transform_3, window_bounds = array<i64: 128, 128>}, {pipeline_mode = #tpu.pipeline_mode<synchronous>, transform_indices = @transform_4, window_bounds = array<i64: 128, 128>}, {pipeline_mode = #tpu.pipeline_mode<synchronous>, transform_indices = @transform_5, window_bounds = array<i64: 1, 128>}, {pipeline_mode = #tpu.pipeline_mode<synchronous>, transform_indices = @transform_6, window_bounds = array<i64: 1, 128>}, {transform_indices = @transform_7, window_bounds = array<i64: 1, 1, 128>}]} {
    %c0 = arith.constant 0 : index
    %c0_0 = arith.constant 0 : index
    %0 = vector.load %arg4[%c0, %c0_0] : memref<128x128xbf16, #tpu.memory_space<vmem>>, vector<128x128xbf16>
    %c0_1 = arith.constant 0 : index
    %c0_2 = arith.constant 0 : index
    %1 = vector.load %arg6[%c0_1, %c0_2] : memref<1x128xbf16, #tpu.memory_space<vmem>>, vector<1x128xbf16>
    %c0_3 = arith.constant 0 : index
    %c0_4 = arith.constant 0 : index
    %2 = vector.load %arg5[%c0_3, %c0_4] : memref<128x128xf32, #tpu.memory_space<vmem>>, vector<128x128xf32>
    %c0_5 = arith.constant 0 : index
    %c0_6 = arith.constant 0 : index
    %c0_7 = arith.constant 0 : index
    %3 = vector.load %arg1[%c0_5, %c0_6, %c0_7] : memref<1x1x128xf32, #tpu.memory_space<vmem>>, vector<1x1x128xf32>
    %4 = vector.shape_cast %3 : vector<1x1x128xf32> to vector<1x128xf32>
    %c0_8 = arith.constant 0 : index
    %c0_9 = arith.constant 0 : index
    %5 = vector.load %arg2[%c0_8, %c0_9] : memref<128x128xf32, #tpu.memory_space<vmem>>, vector<128x128xf32>
    %6 = vector.broadcast %4 : vector<1x128xf32> to vector<128x128xf32>
    %7 = arith.mulf %5, %6 : vector<128x128xf32>
    %c0_10 = arith.constant 0 : index
    %c0_11 = arith.constant 0 : index
    %8 = vector.load %arg3[%c0_10, %c0_11] : memref<128x128xf32, #tpu.memory_space<vmem>>, vector<128x128xf32>
    %9 = arith.addf %7, %8 : vector<128x128xf32>
    %cst = arith.constant 0.000000e+00 : f32
    %10 = vector.broadcast %cst : f32 to vector<128x128xf32>
    %11 = arith.maximumf %9, %10 : vector<128x128xf32>
    %12 = arith.truncf %11 : vector<128x128xf32> to vector<128x128xbf16>
    %cst_12 = arith.constant dense<0.000000e+00> : vector<128x128xf32>
    %13 = tpu.matmul %0, %12, %cst_12 {dimension_numbers = #tpu.dot_dimension_numbers<[1], [0], [0], [1], [0, 0, 1, 1], [], []>} : vector<128x128xbf16>, vector<128x128xbf16>, vector<128x128xf32> -> vector<128x128xf32>
    %14 = arith.addf %13, %2 : vector<128x128xf32>
    %cst_13 = arith.constant 0.000000e+00 : f32
    %15 = vector.broadcast %cst_13 : f32 to vector<128x128xf32>
    %16 = arith.maximumf %14, %15 : vector<128x128xf32>
    %17 = arith.truncf %16 : vector<128x128xf32> to vector<128x128xbf16>
    %cst_14 = arith.constant dense<0.000000e+00> : vector<1x128xf32>
    %18 = tpu.matmul %1, %17, %cst_14 {dimension_numbers = #tpu.dot_dimension_numbers<[1], [0], [0], [1], [0, 0, 1, 1], [], []>} : vector<1x128xbf16>, vector<128x128xbf16>, vector<1x128xf32> -> vector<1x128xf32>
    %c0_15 = arith.constant 0 : index
    %c0_16 = arith.constant 0 : index
    %19 = vector.load %arg7[%c0_15, %c0_16] : memref<1x128xf32, #tpu.memory_space<vmem>>, vector<1x128xf32>
    %20 = arith.addf %18, %19 : vector<1x128xf32>
    %c0_17 = arith.constant 0 : index
    %c0_18 = arith.constant 0 : index
    %c0_19 = arith.constant 0 : index
    %21 = vector.load %arg8[%c0_17, %c0_18, %c0_19] : memref<1x1x128xf32, #tpu.memory_space<vmem>>, vector<1x1x128xf32>
    %22 = vector.shape_cast %21 : vector<1x1x128xf32> to vector<1x128xf32>
    %23 = vector.shape_cast %20 : vector<1x128xf32> to vector<1x1x128xf32>
    tpu.vector_store %arg8[%c0_17, %c0_18, %c0_19], %23 {strides = array<i32>} : memref<1x1x128xf32, #tpu.memory_space<vmem>>, vector<1x1x128xf32>,
    return
  }
  func.func @transform_0(%arg0: i32) -> (i32, i32, i32) {
    %c0_i32 = arith.constant 0 : i32
    %c0_i32_0 = arith.constant 0 : i32
    %c0_i32_1 = arith.constant 0 : i32
    return %arg0, %c0_i32, %c0_i32_0 : i32, i32, i32
  }
  func.func @transform_1(%arg0: i32) -> (i32, i32) {
    %c0_i32 = arith.constant 0 : i32
    %c0_i32_0 = arith.constant 0 : i32
    %c0_i32_1 = arith.constant 0 : i32
    return %c0_i32, %c0_i32_0 : i32, i32
  }
  func.func @transform_2(%arg0: i32) -> (i32, i32) {
    %c0_i32 = arith.constant 0 : i32
    %c0_i32_0 = arith.constant 0 : i32
    %c0_i32_1 = arith.constant 0 : i32
    return %c0_i32, %c0_i32_0 : i32, i32
  }
  func.func @transform_3(%arg0: i32) -> (i32, i32) {
    %c0_i32 = arith.constant 0 : i32
    %c0_i32_0 = arith.constant 0 : i32
    %c0_i32_1 = arith.constant 0 : i32
    return %c0_i32, %c0_i32_0 : i32, i32
  }
  func.func @transform_4(%arg0: i32) -> (i32, i32) {
    %c0_i32 = arith.constant 0 : i32
    %c0_i32_0 = arith.constant 0 : i32
    %c0_i32_1 = arith.constant 0 : i32
    return %c0_i32, %c0_i32_0 : i32, i32
  }
  func.func @transform_5(%arg0: i32) -> (i32, i32) {
    %c0_i32 = arith.constant 0 : i32
    %c0_i32_0 = arith.constant 0 : i32
    %c0_i32_1 = arith.constant 0 : i32
    return %c0_i32, %c0_i32_0 : i32, i32
  }
  func.func @transform_6(%arg0: i32) -> (i32, i32) {
    %c0_i32 = arith.constant 0 : i32
    %c0_i32_0 = arith.constant 0 : i32
    %c0_i32_1 = arith.constant 0 : i32
    return %c0_i32, %c0_i32_0 : i32, i32
  }
  func.func @transform_7(%arg0: i32) -> (i32, i32, i32) {
    %c0_i32 = arith.constant 0 : i32
    %c0_i32_0 = arith.constant 0 : i32
    %c0_i32_1 = arith.constant 0 : i32
    return %arg0, %c0_i32, %c0_i32_0 : i32, i32, i32
  }
}

</mosaic_0001>

<llo_original>
// kernel: tpu_custom_call.1
$region0: #{tpu_custom_call.1}
  #allocation0 [shape = 'u32[]', space=smem, size = 0x4, offset = 0x4, fixed_abs, tag = 'smem constant byte address 0x4 - core index']
  #allocation1 [shape = 'u32[144,128]{1,0:T(1,128)}', space=vmem, size = 0x12000, scoped, tag = 'internal scratch']
  %s0 = inlined_call_operand.hbm [shape: f32[2,1,128], index: 0, kind: input, shape index: {}]
  %s1 = inlined_call_operand.hbm [shape: f32[128,128], index: 1, kind: input, shape index: {}]
  %s2 = inlined_call_operand.hbm [shape: f32[128,128], index: 2, kind: input, shape index: {}]
  %s3 = inlined_call_operand.hbm [shape: bf16[128,128], index: 3, kind: input, shape index: {}]
  %s4 = inlined_call_operand.hbm [shape: f32[128,128], index: 4, kind: input, shape index: {}]
  %s5 = inlined_call_operand.vmem [shape: bf16[1,128], index: 5, kind: input, shape index: {}]
  %s6 = inlined_call_operand.vmem [shape: f32[1,128], index: 6, kind: input, shape index: {}]
  %s7 = inlined_call_operand.hbm [shape: f32[2,1,128], index: 7, kind: output, shape index: {}]
  %s8 = sld [smem:[#allocation0]]
  $region81: #{tpu_custom_call.1} parent=0
    _
  %s10 = ssub.s32 1, %s8
  %s11 = scalar_select 0, %s10, %s8
  $region1: #{tpu_custom_call.1} parent=0
    #allocation2 [shape = 'u8[1024]{0}', space=vmem, size = 0x400, scoped, tag = 'input window, operand 0']
    #allocation3 [shape = 's32[2]{0}', space=sflag, size = 0x8, scoped, tag = 'scoped memory for tpu_custom_call.1']
    #allocation4 [shape = 's32[2]{0}', space=sflag, size = 0x8, scoped, tag = 'scoped memory for tpu_custom_call.1']
    #allocation5 [shape = 'u8[65536]{0}', space=vmem, size = 0x10000, scoped, tag = 'input window, operand 1, single buffered']
    #allocation6 [shape = 's32[1]{0}', space=sflag, size = 0x4, scoped, tag = 'scoped memory for tpu_custom_call.1']
    #allocation7 [shape = 'u8[65536]{0}', space=vmem, size = 0x10000, scoped, tag = 'input window, operand 2, single buffered']
    #allocation8 [shape = 'u8[32768]{0}', space=vmem, size = 0x8000, scoped, tag = 'input window, operand 3, single buffered']
    #allocation9 [shape = 's32[1]{0}', space=sflag, size = 0x4, scoped, tag = 'scoped memory for tpu_custom_call.1']
    #allocation10 [shape = 'u8[65536]{0}', space=vmem, size = 0x10000, scoped, tag = 'input window, operand 4, single buffered']
    #allocation11 [shape = 'u8[1024]{0}', space=vmem, size = 0x400, scoped, tag = 'output window, operand 0']
    %12 = vsyncpa [#allocation3], 0
    %s13 = scalar_lea.sflag [#allocation3], 1
    %14 = vsyncpa %s13, 0
    %15 = vsyncpa [#allocation6], 0
    %16 = vsyncpa [#allocation9], 0
    %17 = vsyncpa [#allocation4], 0
    %s18 = scalar_lea.sflag [#allocation4], 1
    %19 = vsyncpa %s18, 0
    loop: start=0, step=1, limit=4
    $region2: #{tpu_custom_call.1} parent=1 // loop_pre_header
      _
    $region3: #{tpu_custom_call.1} parent=1 // loop_header
      %s21 = sphi 0, %s25
      %p22 = scmp.ge.s32.totalorder %s21, 4
      %s31 = sphi 0, %s33
      %s34 = sphi 0, %s31
      %s35 = sphi 0, %s34
      %s51 = sphi 0, %s35
      %s55 = sphi 0, %s55
      %s57 = sphi 0, %s55
      %s58 = sphi 0, %s57
      %s72 = sphi 0, %s58
      %s76 = sphi 0, %s76
      %s78 = sphi 0, %s76
      %s79 = sphi 0, %s78
      %s93 = sphi 0, %s79
      %s97 = sphi 0, %s97
      %s99 = sphi 0, %s97
      %s100 = sphi 0, %s99
      %s114 = sphi 0, %s100
      %s118 = sphi 0, %s118
      %s120 = sphi 0, %s118
      %s121 = sphi 0, %s120
      %s135 = sphi 0, %s121
      %s139 = sphi 0, %s139
      %s141 = sphi 0, %s139
      %s142 = sphi 0, %s141
      %s156 = sphi 0, %s142
      %s160 = sphi 0, %s160
      %s162 = sphi 0, %s160
      %s163 = sphi 0, %s162
      %s177 = sphi 0, %s163
      %s183 = sphi 0, %s185
      %s186 = sphi 0, %s183
      %s187 = sphi 0, %s186
      %s203 = sphi 0, %s187
    $region4: #{tpu_custom_call.1} parent=1 // loop_header_branch
      %24 = sbr.rel (%p22) target = $region8
    $region5: #{tpu_custom_call.1} parent=1 // loop_body
      %s26 = ssub.s32 %s21, 1
      %s27 = ssub.s32 %s21, 2
      %s28 = sadd.s32 %s21, 1
      %s29 = ssub.s32 %s21, %s28
      %p30 = scmp.eq.s32.totalorder %s29, 0
      %s32 = sadd.s32 %s31, 1
      %s33 = scalar_select %p30, %s31, %s32
      %p36 = pneg %p30
      %p37 = scmp.eq.s32.totalorder %s21, 1
      %p38 = por %p36, %p37
      %p39 = scmp.ne.s32.totalorder %s31, %s34
      %p40 = scmp.eq.s32.totalorder %s21, 0
      %p41 = por %p39, %p40
      %p42 = scmp.ne.s32.totalorder %s31, %s34
      %p43 = scmp.eq.s32.totalorder %s26, 1
      %p44 = por %p42, %p43
      %p45 = scmp.ne.s32.totalorder %s34, %s35
      %p46 = scmp.eq.s32.totalorder %s26, 0
      %p47 = por %p45, %p46
      %p48 = scmp.ne.s32.totalorder %s34, %s35
      %p49 = scmp.eq.s32.totalorder %s27, 1
      %p50 = por %p48, %p49
      %p52 = scmp.ne.s32.totalorder %s35, %s51
      %p53 = scmp.eq.s32.totalorder %s27, 0
      %p54 = por %p52, %p53
      %s56 = sadd.s32 %s55, 1
      %p59 = scmp.eq.s32.totalorder %s21, 1
      %p60 = scmp.ne.s32.totalorder %s55, %s57
      %p61 = scmp.eq.s32.totalorder %s21, 0
      %p62 = por %p60, %p61
      %p63 = scmp.ne.s32.totalorder %s55, %s57
      %p64 = scmp.eq.s32.totalorder %s26, 1
      %p65 = por %p63, %p64
      %p66 = scmp.ne.s32.totalorder %s57, %s58
      %p67 = scmp.eq.s32.totalorder %s26, 0
      %p68 = por %p66, %p67
      %p69 = scmp.ne.s32.totalorder %s57, %s58
      %p70 = scmp.eq.s32.totalorder %s27, 1
      %p71 = por %p69, %p70
      %p73 = scmp.ne.s32.totalorder %s58, %s72
      %p74 = scmp.eq.s32.totalorder %s27, 0
      %p75 = por %p73, %p74
      %s77 = sadd.s32 %s76, 1
      %p80 = scmp.eq.s32.totalorder %s21, 1
      %p81 = scmp.ne.s32.totalorder %s76, %s78
      %p82 = scmp.eq.s32.totalorder %s21, 0
      %p83 = por %p81, %p82
      %p84 = scmp.ne.s32.totalorder %s76, %s78
      %p85 = scmp.eq.s32.totalorder %s26, 1
      %p86 = por %p84, %p85
      %p87 = scmp.ne.s32.totalorder %s78, %s79
      %p88 = scmp.eq.s32.totalorder %s26, 0
      %p89 = por %p87, %p88
      %p90 = scmp.ne.s32.totalorder %s78, %s79
      %p91 = scmp.eq.s32.totalorder %s27, 1
      %p92 = por %p90, %p91
      %p94 = scmp.ne.s32.totalorder %s79, %s93
      %p95 = scmp.eq.s32.totalorder %s27, 0
      %p96 = por %p94, %p95
      %s98 = sadd.s32 %s97, 1
      %p101 = scmp.eq.s32.totalorder %s21, 1
      %p102 = scmp.ne.s32.totalorder %s97, %s99
      %p103 = scmp.eq.s32.totalorder %s21, 0
      %p104 = por %p102, %p103
      %p105 = scmp.ne.s32.totalorder %s97, %s99
      %p106 = scmp.eq.s32.totalorder %s26, 1
      %p107 = por %p105, %p106
      %p108 = scmp.ne.s32.totalorder %s99, %s100
      %p109 = scmp.eq.s32.totalorder %s26, 0
      %p110 = por %p108, %p109
      %p111 = scmp.ne.s32.totalorder %s99, %s100
      %p112 = scmp.eq.s32.totalorder %s27, 1
      %p113 = por %p111, %p112
      %p115 = scmp.ne.s32.totalorder %s100, %s114
      %p116 = scmp.eq.s32.totalorder %s27, 0
      %p117 = por %p115, %p116
      %s119 = sadd.s32 %s118, 1
      %p122 = scmp.eq.s32.totalorder %s21, 1
      %p123 = scmp.ne.s32.totalorder %s118, %s120
      %p124 = scmp.eq.s32.totalorder %s21, 0
      %p125 = por %p123, %p124
      %p126 = scmp.ne.s32.totalorder %s118, %s120
      %p127 = scmp.eq.s32.totalorder %s26, 1
      %p128 = por %p126, %p127
      %p129 = scmp.ne.s32.totalorder %s120, %s121
      %p130 = scmp.eq.s32.totalorder %s26, 0
      %p131 = por %p129, %p130
      %p132 = scmp.ne.s32.totalorder %s120, %s121
      %p133 = scmp.eq.s32.totalorder %s27, 1
      %p134 = por %p132, %p133
      %p136 = scmp.ne.s32.totalorder %s121, %s135
      %p137 = scmp.eq.s32.totalorder %s27, 0
      %p138 = por %p136, %p137
      %s140 = sadd.s32 %s139, 1
      %p143 = scmp.eq.s32.totalorder %s21, 1
      %p144 = scmp.ne.s32.totalorder %s139, %s141
      %p145 = scmp.eq.s32.totalorder %s21, 0
      %p146 = por %p144, %p145
      %p147 = scmp.ne.s32.totalorder %s139, %s141
      %p148 = scmp.eq.s32.totalorder %s26, 1
      %p149 = por %p147, %p148
      %p150 = scmp.ne.s32.totalorder %s141, %s142
      %p151 = scmp.eq.s32.totalorder %s26, 0
      %p152 = por %p150, %p151
      %p153 = scmp.ne.s32.totalorder %s141, %s142
      %p154 = scmp.eq.s32.totalorder %s27, 1
      %p155 = por %p153, %p154
      %p157 = scmp.ne.s32.totalorder %s142, %s156
      %p158 = scmp.eq.s32.totalorder %s27, 0
      %p159 = por %p157, %p158
      %s161 = sadd.s32 %s160, 1
      %p164 = scmp.eq.s32.totalorder %s21, 1
      %p165 = scmp.ne.s32.totalorder %s160, %s162
      %p166 = scmp.eq.s32.totalorder %s21, 0
      %p167 = por %p165, %p166
      %p168 = scmp.ne.s32.totalorder %s160, %s162
      %p169 = scmp.eq.s32.totalorder %s26, 1
      %p170 = por %p168, %p169
      %p171 = scmp.ne.s32.totalorder %s162, %s163
      %p172 = scmp.eq.s32.totalorder %s26, 0
      %p173 = por %p171, %p172
      %p174 = scmp.ne.s32.totalorder %s162, %s163
      %p175 = scmp.eq.s32.totalorder %s27, 1
      %p176 = por %p174, %p175
      %p178 = scmp.ne.s32.totalorder %s163, %s177
      %p179 = scmp.eq.s32.totalorder %s27, 0
      %p180 = por %p178, %p179
      %s181 = ssub.s32 %s21, %s28
      %p182 = scmp.eq.s32.totalorder %s181, 0
      %s184 = sadd.s32 %s183, 1
      %s185 = scalar_select %p182, %s183, %s184
      %p188 = pneg %p182
      %p189 = scmp.eq.s32.totalorder %s21, 1
      %p190 = por %p188, %p189
      %p191 = scmp.ne.s32.totalorder %s183, %s186
      %p192 = scmp.eq.s32.totalorder %s21, 0
      %p193 = por %p191, %p192
      %p194 = scmp.ne.s32.totalorder %s183, %s186
      %p195 = scmp.eq.s32.totalorder %s26, 1
      %p196 = por %p194, %p195
      %p197 = scmp.ne.s32.totalorder %s186, %s187
      %p198 = scmp.eq.s32.totalorder %s26, 0
      %p199 = por %p197, %p198
      %p200 = scmp.ne.s32.totalorder %s186, %s187
      %p201 = scmp.eq.s32.totalorder %s27, 1
      %p202 = por %p200, %p201
      %p204 = scmp.ne.s32.totalorder %s187, %s203
      %p205 = scmp.eq.s32.totalorder %s27, 0
      %p206 = por %p204, %p205
      %p207 = scmp.le.s32.totalorder 1, %s21
      %p208 = scmp.lt.s32.totalorder %s21, 3
      %p209 = pnand %p207, %p208
      %p210 = pneg %p209
      // Predicated region
      $region9: #{tpu_custom_call.1} parent=5 // pred_check
        _
      $region10: #{tpu_custom_call.1} parent=5 // pred_check_branch
        %212 = sbr.rel (%p209) target = $region12
      $region11: #{tpu_custom_call.1} parent=5 // pred_region
        %s213 = ssub.s32 %s21, 1
        // Predicated region
        $region13: #{tpu_custom_call.1} parent=11 // pred_check
          %p214 = pneg %p68
        $region14: #{tpu_custom_call.1} parent=11 // pred_check_branch
          %216 = sbr.rel (%p214) target = $region16
        $region15: #{tpu_custom_call.1} parent=11 // pred_region
          %s218 = ssub.s32 2048, 2048
          %219 = vsyncadd [#allocation6], %s218
          %s220 = sshll.u32 [#allocation5], 4
          %s221 = int_to_ptr.vmem [resolvable:$true] %s220
          %226 = dma.hbm_to_vmem [thread:$0]  %s1, 2048, %s221, [#allocation6], 128, 128, 8
        $region16: #{tpu_custom_call.1} parent=11 // pred_fallthru
          _
        // Predicated region
        $region17: #{tpu_custom_call.1} parent=11 // pred_check
          %p227 = pneg %p89
        $region18: #{tpu_custom_call.1} parent=11 // pred_check_branch
          %229 = sbr.rel (%p227) target = $region20
        $region19: #{tpu_custom_call.1} parent=11 // pred_region
          %s231 = ssub.s32 2048, 2048
          %232 = vsyncadd [#allocation6], %s231
          %s233 = sshll.u32 [#allocation7], 4
          %s234 = int_to_ptr.vmem [resolvable:$true] %s233
          %239 = dma.hbm_to_vmem [thread:$0]  %s2, 2048, %s234, [#allocation6], 128, 128, 8
        $region20: #{tpu_custom_call.1} parent=11 // pred_fallthru
          _
        // Predicated region
        $region21: #{tpu_custom_call.1} parent=11 // pred_check
          %p240 = pneg %p110
        $region22: #{tpu_custom_call.1} parent=11 // pred_check_branch
          %242 = sbr.rel (%p240) target = $region24
        $region23: #{tpu_custom_call.1} parent=11 // pred_region
          %s244 = ssub.s32 1024, 1024
          %245 = vsyncadd [#allocation9], %s244
          %s246 = sshll.u32 [#allocation8], 4
          %s247 = int_to_ptr.vmem [resolvable:$true] %s246
          %252 = dma.hbm_to_vmem [thread:$0]  %s3, 1024, %s247, [#allocation9], 64, 64, 4
        $region24: #{tpu_custom_call.1} parent=11 // pred_fallthru
          _
        // Predicated region
        $region25: #{tpu_custom_call.1} parent=11 // pred_check
          %p253 = pneg %p131
        $region26: #{tpu_custom_call.1} parent=11 // pred_check_branch
          %255 = sbr.rel (%p253) target = $region28
        $region27: #{tpu_custom_call.1} parent=11 // pred_region
          %s257 = ssub.s32 2048, 2048
          %258 = vsyncadd [#allocation9], %s257
          %s259 = sshll.u32 [#allocation10], 4
          %s260 = int_to_ptr.vmem [resolvable:$true] %s259
          %265 = dma.hbm_to_vmem [thread:$0]  %s4, 2048, %s260, [#allocation9], 128, 128, 8
        $region28: #{tpu_custom_call.1} parent=11 // pred_fallthru
          _
        // Predicated region
        $region29: #{tpu_custom_call.1} parent=11 // pred_check
          %p266 = pneg %p152
        $region30: #{tpu_custom_call.1} parent=11 // pred_check_branch
          %268 = sbr.rel (%p266) target = $region32
        $region31: #{tpu_custom_call.1} parent=11 // pred_region
          _
        $region32: #{tpu_custom_call.1} parent=11 // pred_fallthru
          _
        // Predicated region
        $region33: #{tpu_custom_call.1} parent=11 // pred_check
          %p269 = pneg %p173
        $region34: #{tpu_custom_call.1} parent=11 // pred_check_branch
          %271 = sbr.rel (%p269) target = $region36
        $region35: #{tpu_custom_call.1} parent=11 // pred_region
          _
        $region36: #{tpu_custom_call.1} parent=11 // pred_fallthru
          _
      $region12: #{tpu_custom_call.1} parent=5 // pred_fallthru
        _
      %p272 = scmp.lt.s32.totalorder %s21, 2
      // Predicated region
      $region37: #{tpu_custom_call.1} parent=5 // pred_check
        %p273 = pneg %p272
      $region38: #{tpu_custom_call.1} parent=5 // pred_check_branch
        %275 = sbr.rel (%p273) target = $region40
      $region39: #{tpu_custom_call.1} parent=5 // pred_region
        // Predicated region
        $region41: #{tpu_custom_call.1} parent=39 // pred_check
          %p276 = pneg %p41
        $region42: #{tpu_custom_call.1} parent=39 // pred_check_branch
          %278 = sbr.rel (%p276) target = $region44
        $region43: #{tpu_custom_call.1} parent=39 // pred_region
          %s279 = sand.u32 %s31, 1
          %s280 = scalar_lea.sflag [#allocation3], %s279
          %s281 = sand.u32 %s31, 1
          %s282 = scalar_lea.vmem [#allocation2], %s281
          %s284 = ssub.s32 16, 16
          %285 = vsyncadd %s280, %s284
          %s286 = smul.addr %s21, 16
          %s287 = scalar_lea.hbm %s0, %s286
          %s289 = sshll.u32 %s282, 4
          %s290 = int_to_ptr.vmem [resolvable:$true] %s289
          %292 = dma.hbm_to_vmem [thread:$0]  %s287, 16, %s290, %s280
        $region44: #{tpu_custom_call.1} parent=39 // pred_fallthru
          _
      $region40: #{tpu_custom_call.1} parent=5 // pred_fallthru
        _
      %p293 = scmp.le.s32.totalorder 1, %s21
      %p294 = scmp.lt.s32.totalorder %s21, 3
      %p295 = pnand %p293, %p294
      %p296 = pneg %p295
      // Predicated region
      $region45: #{tpu_custom_call.1} parent=5 // pred_check
        _
      $region46: #{tpu_custom_call.1} parent=5 // pred_check_branch
        %298 = sbr.rel (%p295) target = $region48
      $region47: #{tpu_custom_call.1} parent=5 // pred_region
        %s299 = ssub.s32 %s21, 1
        %s300 = sand.u32 %s34, 1
        %s301 = scalar_lea.sflag [#allocation3], %s300
        %s302 = sand.u32 %s34, 1
        %s303 = scalar_lea.vmem [#allocation2], %s302
        // Predicated region
        $region49: #{tpu_custom_call.1} parent=47 // pred_check
          %p304 = pneg %p47
        $region50: #{tpu_custom_call.1} parent=47 // pred_check_branch
          %306 = sbr.rel (%p304) target = $region52
        $region51: #{tpu_custom_call.1} parent=47 // pred_region
          %307 = dma.done %s301, 16
        $region52: #{tpu_custom_call.1} parent=47 // pred_fallthru
          _
        // Predicated region
        $region53: #{tpu_custom_call.1} parent=47 // pred_check
          %p308 = pneg %p68
        $region54: #{tpu_custom_call.1} parent=47 // pred_check_branch
          %310 = sbr.rel (%p308) target = $region56
        $region55: #{tpu_custom_call.1} parent=47 // pred_region
          %311 = dma.done [#allocation6], 2048
        $region56: #{tpu_custom_call.1} parent=47 // pred_fallthru
          _
        // Predicated region
        $region57: #{tpu_custom_call.1} parent=47 // pred_check
          %p312 = pneg %p89
        $region58: #{tpu_custom_call.1} parent=47 // pred_check_branch
          %314 = sbr.rel (%p312) target = $region60
        $region59: #{tpu_custom_call.1} parent=47 // pred_region
          %315 = dma.done [#allocation6], 2048
        $region60: #{tpu_custom_call.1} parent=47 // pred_fallthru
          _
        // Predicated region
        $region61: #{tpu_custom_call.1} parent=47 // pred_check
          %p316 = pneg %p110
        $region62: #{tpu_custom_call.1} parent=47 // pred_check_branch
          %318 = sbr.rel (%p316) target = $region64
        $region63: #{tpu_custom_call.1} parent=47 // pred_region
          %319 = dma.done [#allocation9], 1024
        $region64: #{tpu_custom_call.1} parent=47 // pred_fallthru
          _
        // Predicated region
        $region65: #{tpu_custom_call.1} parent=47 // pred_check
          %p320 = pneg %p131
        $region66: #{tpu_custom_call.1} parent=47 // pred_check_branch
          %322 = sbr.rel (%p320) target = $region68
        $region67: #{tpu_custom_call.1} parent=47 // pred_region
          %323 = dma.done [#allocation9], 2048
        $region68: #{tpu_custom_call.1} parent=47 // pred_fallthru
          _
        %s324 = sand.u32 %s34, 1
        %s325 = scalar_lea.sflag [#allocation3], %s324
        %s326 = sand.u32 %s34, 1
        %s327 = scalar_lea.vmem [#allocation2], %s326
        %p328 = pneg %p47
        %p329 = pneg %p44
        %p330 = pneg %p68
        %p331 = pneg %p65
        %p332 = pneg %p89
        %p333 = pneg %p86
        %p334 = pneg %p110
        %p335 = pneg %p107
        %p336 = pneg %p131
        %p337 = pneg %p128
        %p338 = pneg %p152
        %p339 = pneg %p149
        %p340 = pneg %p173
        %p341 = pneg %p170
        %p342 = pneg %p199
        %p343 = pneg %p196
        %s344 = sand.u32 %s186, 1
        %s345 = scalar_lea.sflag [#allocation4], %s344
        %s346 = sand.u32 %s186, 1
        %s347 = scalar_lea.vmem [#allocation11], %s346
        %v349 = vld [vmem:[#allocation8] sm:$0xf]
        %v350 = vld [vmem:[#allocation8 + $0x4] sm:$0xf]
        %v351 = vld [vmem:[#allocation8 + $0x8] sm:$0xf]
        %v352 = vld [vmem:[#allocation8 + $0xc] sm:$0xf]
        %v353 = vld [vmem:[#allocation8 + $0x10] sm:$0xf]
        %v354 = vld [vmem:[#allocation8 + $0x14] sm:$0xf]
        %v355 = vld [vmem:[#allocation8 + $0x18] sm:$0xf]
        %v356 = vld [vmem:[#allocation8 + $0x1c] sm:$0xf]
        %v357 = vld [vmem:[#allocation8 + $0x20] sm:$0xf]
        %v358 = vld [vmem:[#allocation8 + $0x24] sm:$0xf]
        %v359 = vld [vmem:[#allocation8 + $0x28] sm:$0xf]
        %v360 = vld [vmem:[#allocation8 + $0x2c] sm:$0xf]
        %v361 = vld [vmem:[#allocation8 + $0x30] sm:$0xf]
        %v362 = vld [vmem:[#allocation8 + $0x34] sm:$0xf]
        %v363 = vld [vmem:[#allocation8 + $0x38] sm:$0xf]
        %v364 = vld [vmem:[#allocation8 + $0x3c] sm:$0xf]
        %v365 = vld [vmem:[%s5] sm:$0x1]
        %v366 = vld [vmem:[#allocation10] sm:$0xff]
        %v367 = vld [vmem:[#allocation10 + $0x8] sm:$0xff]
        %v368 = vld [vmem:[#allocation10 + $0x10] sm:$0xff]
        %v369 = vld [vmem:[#allocation10 + $0x18] sm:$0xff]
        %v370 = vld [vmem:[#allocation10 + $0x20] sm:$0xff]
        %v371 = vld [vmem:[#allocation10 + $0x28] sm:$0xff]
        %v372 = vld [vmem:[#allocation10 + $0x30] sm:$0xff]
        %v373 = vld [vmem:[#allocation10 + $0x38] sm:$0xff]
        %v374 = vld [vmem:[#allocation10 + $0x40] sm:$0xff]
        %v375 = vld [vmem:[#allocation10 + $0x48] sm:$0xff]
        %v376 = vld [vmem:[#allocation10 + $0x50] sm:$0xff]
        %v377 = vld [vmem:[#allocation10 + $0x58] sm:$0xff]
        %v378 = vld [vmem:[#allocation10 + $0x60] sm:$0xff]
        %v379 = vld [vmem:[#allocation10 + $0x68] sm:$0xff]
        %v380 = vld [vmem:[#allocation10 + $0x70] sm:$0xff]
        %v381 = vld [vmem:[#allocation10 + $0x78] sm:$0xff]
        %v382 = vld [vmem:[%s303] sm:$0x1]
        %v383 = vld [vmem:[#allocation5] sm:$0xff]
        %v384 = vld [vmem:[#allocation5 + $0x8] sm:$0xff]
        %v385 = vld [vmem:[#allocation5 + $0x10] sm:$0xff]
        %v386 = vld [vmem:[#allocation5 + $0x18] sm:$0xff]
        %v387 = vld [vmem:[#allocation5 + $0x20] sm:$0xff]
        %v388 = vld [vmem:[#allocation5 + $0x28] sm:$0xff]
        %v389 = vld [vmem:[#allocation5 + $0x30] sm:$0xff]
        %v390 = vld [vmem:[#allocation5 + $0x38] sm:$0xff]
        %v391 = vld [vmem:[#allocation5 + $0x40] sm:$0xff]
        %v392 = vld [vmem:[#allocation5 + $0x48] sm:$0xff]
        %v393 = vld [vmem:[#allocation5 + $0x50] sm:$0xff]
        %v394 = vld [vmem:[#allocation5 + $0x58] sm:$0xff]
        %v395 = vld [vmem:[#allocation5 + $0x60] sm:$0xff]
        %v396 = vld [vmem:[#allocation5 + $0x68] sm:$0xff]
        %v397 = vld [vmem:[#allocation5 + $0x70] sm:$0xff]
        %v398 = vld [vmem:[#allocation5 + $0x78] sm:$0xff]
        %v400 = vlaneseq
        %v401 = vshrl.u32 %v400, 7
        %v402 = vsub.s32 0, %v401
        %v403 = vrot.slane %v382, %v402
        %v405 = vmul.f32 %v383, %v403
        %v406 = vmul.f32 %v384, %v403
        %v407 = vmul.f32 %v385, %v403
        %v408 = vmul.f32 %v386, %v403
        %v409 = vmul.f32 %v387, %v403
        %v410 = vmul.f32 %v388, %v403
        %v411 = vmul.f32 %v389, %v403
        %v412 = vmul.f32 %v390, %v403
        %v413 = vmul.f32 %v391, %v403
        %v414 = vmul.f32 %v392, %v403
        %v415 = vmul.f32 %v393, %v403
        %v416 = vmul.f32 %v394, %v403
        %v417 = vmul.f32 %v395, %v403
        %v418 = vmul.f32 %v396, %v403
        %v419 = vmul.f32 %v397, %v403
        %v420 = vmul.f32 %v398, %v403
        %v421 = vld [vmem:[#allocation7] sm:$0xff]
        %v422 = vld [vmem:[#allocation7 + $0x8] sm:$0xff]
        %v423 = vld [vmem:[#allocation7 + $0x10] sm:$0xff]
        %v424 = vld [vmem:[#allocation7 + $0x18] sm:$0xff]
        %v425 = vld [vmem:[#allocation7 + $0x20] sm:$0xff]
        %v426 = vld [vmem:[#allocation7 + $0x28] sm:$0xff]
        %v427 = vld [vmem:[#allocation7 + $0x30] sm:$0xff]
        %v428 = vld [vmem:[#allocation7 + $0x38] sm:$0xff]
        %v429 = vld [vmem:[#allocation7 + $0x40] sm:$0xff]
        %v430 = vld [vmem:[#allocation7 + $0x48] sm:$0xff]
        %v431 = vld [vmem:[#allocation7 + $0x50] sm:$0xff]
        %v432 = vld [vmem:[#allocation7 + $0x58] sm:$0xff]
        %v433 = vld [vmem:[#allocation7 + $0x60] sm:$0xff]
        %v434 = vld [vmem:[#allocation7 + $0x68] sm:$0xff]
        %v435 = vld [vmem:[#allocation7 + $0x70] sm:$0xff]
        %v436 = vld [vmem:[#allocation7 + $0x78] sm:$0xff]
        %v437 = vadd.f32 %v405, %v421
        %v438 = vadd.f32 %v406, %v422
        %v439 = vadd.f32 %v407, %v423
        %v440 = vadd.f32 %v408, %v424
        %v441 = vadd.f32 %v409, %v425
        %v442 = vadd.f32 %v410, %v426
        %v443 = vadd.f32 %v411, %v427
        %v444 = vadd.f32 %v412, %v428
        %v445 = vadd.f32 %v413, %v429
        %v446 = vadd.f32 %v414, %v430
        %v447 = vadd.f32 %v415, %v431
        %v448 = vadd.f32 %v416, %v432
        %v449 = vadd.f32 %v417, %v433
        %v450 = vadd.f32 %v418, %v434
        %v451 = vadd.f32 %v419, %v435
        %v452 = vadd.f32 %v420, %v436
        %v453 = vmax.f32 %v437, 0.0
        %v454 = vmax.f32 %v438, 0.0
        %v455 = vmax.f32 %v439, 0.0
        %v456 = vmax.f32 %v440, 0.0
        %v457 = vmax.f32 %v441, 0.0
        %v458 = vmax.f32 %v442, 0.0
        %v459 = vmax.f32 %v443, 0.0
        %v460 = vmax.f32 %v444, 0.0
        %v461 = vmax.f32 %v445, 0.0
        %v462 = vmax.f32 %v446, 0.0
        %v463 = vmax.f32 %v447, 0.0
        %v464 = vmax.f32 %v448, 0.0
        %v465 = vmax.f32 %v449, 0.0
        %v466 = vmax.f32 %v450, 0.0
        %v467 = vmax.f32 %v451, 0.0
        %v468 = vmax.f32 %v452, 0.0
        %v469 = vpack.c.bf16 %v454, %v453
        %v470 = vpack.c.bf16 %v456, %v455
        %v471 = vpack.c.bf16 %v458, %v457
        %v472 = vpack.c.bf16 %v460, %v459
        %v473 = vpack.c.bf16 %v462, %v461
        %v474 = vpack.c.bf16 %v464, %v463
        %v475 = vpack.c.bf16 %v466, %v465
        %v476 = vpack.c.bf16 %v468, %v467
        %v493 = vunpack.c.l.b16 %v349
        %v494 = vunpack.c.l.b16 %v350
        %v495 = vunpack.c.l.b16 %v351
        %v496 = vunpack.c.l.b16 %v352
        %v497 = vunpack.c.l.b16 %v353
        %v498 = vunpack.c.l.b16 %v354
        %v499 = vunpack.c.l.b16 %v355
        %v500 = vunpack.c.l.b16 %v356
        %v501 = vunpack.c.l.b16 %v357
        %v502 = vunpack.c.l.b16 %v358
        %v503 = vunpack.c.l.b16 %v359
        %v504 = vunpack.c.l.b16 %v360
        %v505 = vunpack.c.l.b16 %v361
        %v506 = vunpack.c.l.b16 %v362
        %v507 = vunpack.c.l.b16 %v363
        %v508 = vunpack.c.l.b16 %v364
        %v509 = vpack.c.b16 %v494, %v493
        %v510 = vpack.c.b16 %v496, %v495
        %v511 = vpack.c.b16 %v498, %v497
        %v512 = vpack.c.b16 %v500, %v499
        %v513 = vpack.c.b16 %v502, %v501
        %v514 = vpack.c.b16 %v504, %v503
        %v515 = vpack.c.b16 %v506, %v505
        %v516 = vpack.c.b16 %v508, %v507
        %525 = vmatprep.subr.bf16.mxu0 0
        %526 = vmatpush1.bf16.msra.mxu0 %v469
        %527 = vmatprep.subr.bf16.mxu0 0
        %528 = vmatpush1.bf16.msra.mxu0 %v470
        %529 = vmatprep.subr.bf16.mxu0 0
        %530 = vmatpush1.bf16.msra.mxu0 %v471
        %531 = vmatprep.subr.bf16.mxu0 0
        %532 = vmatpush1.bf16.msra.mxu0 %v472
        %533 = vmatprep.subr.bf16.mxu0 0
        %534 = vmatpush1.bf16.msra.mxu0 %v473
        %535 = vmatprep.subr.bf16.mxu0 0
        %536 = vmatpush1.bf16.msra.mxu0 %v474
        %537 = vmatprep.subr.bf16.mxu0 0
        %538 = vmatpush1.bf16.msra.mxu0 %v475
        %539 = vmatprep.subr.bf16.mxu0 0
        %540 = vmatpush1.bf16.msra.mxu0 %v476
        %541 = vmatprep.subr.bf16.mxu0 0
        %542 = vmatpush1.bf16.msra.mxu0 0
        %543 = vmatprep.subr.bf16.mxu0 0
        %544 = vmatpush1.bf16.msra.mxu0 0
        %545 = vmatprep.subr.bf16.mxu0 0
        %546 = vmatpush1.bf16.msra.mxu0 0
        %547 = vmatprep.subr.bf16.mxu0 0
        %548 = vmatpush1.bf16.msra.mxu0 0
        %549 = vmatprep.subr.bf16.mxu0 0
        %550 = vmatpush1.bf16.msra.mxu0 0
        %551 = vmatprep.subr.bf16.mxu0 0
        %552 = vmatpush1.bf16.msra.mxu0 0
        %553 = vmatprep.subr.bf16.mxu0 0
        %554 = vmatpush1.bf16.msra.mxu0 0
        %555 = vmatprep.subr.bf16.mxu0 0
        %556 = vmatpush1.bf16.msra.mxu0 0
        %557 = vmatprep.mubr.bf16.mxu0 0
        %558 = vmatmul.mubr.bf16.gmra.mrb[0].mxu0 %v509
        %v559 = vpop.f32.mrb[0].mxu0
        %v560 = vadd.f32 %v366, %v559
        %v561 = vpop.f32.mrb[0].mxu0
        %v562 = vpop.f32.mrb[0].mxu0
        %v563 = vadd.f32 %v367, %v562
        %v564 = vpop.f32.mrb[0].mxu0
        %565 = vmatprep.mubr.bf16.mxu0 0
        %566 = vmatmul.mubr.bf16.gmra.mrb[0].mxu0 %v510
        %v567 = vpop.f32.mrb[0].mxu0
        %v568 = vadd.f32 %v368, %v567
        %v569 = vpop.f32.mrb[0].mxu0
        %v570 = vpop.f32.mrb[0].mxu0
        %v571 = vadd.f32 %v369, %v570
        %v572 = vpop.f32.mrb[0].mxu0
        %573 = vmatprep.mubr.bf16.mxu0 0
        %574 = vmatmul.mubr.bf16.gmra.mrb[0].mxu0 %v511
        %v575 = vpop.f32.mrb[0].mxu0
        %v576 = vadd.f32 %v370, %v575
        %v577 = vpop.f32.mrb[0].mxu0
        %v578 = vpop.f32.mrb[0].mxu0
        %v579 = vadd.f32 %v371, %v578
        %v580 = vpop.f32.mrb[0].mxu0
        %581 = vmatprep.mubr.bf16.mxu0 0
        %582 = vmatmul.mubr.bf16.gmra.mrb[0].mxu0 %v512
        %v583 = vpop.f32.mrb[0].mxu0
        %v584 = vadd.f32 %v372, %v583
        %v585 = vpop.f32.mrb[0].mxu0
        %v586 = vpop.f32.mrb[0].mxu0
        %v587 = vadd.f32 %v373, %v586
        %v588 = vpop.f32.mrb[0].mxu0
        %589 = vmatprep.mubr.bf16.mxu0 0
        %590 = vmatmul.mubr.bf16.gmra.mrb[0].mxu0 %v513
        %v591 = vpop.f32.mrb[0].mxu0
        %v592 = vadd.f32 %v374, %v591
        %v593 = vpop.f32.mrb[0].mxu0
        %v594 = vpop.f32.mrb[0].mxu0
        %v595 = vadd.f32 %v375, %v594
        %v596 = vpop.f32.mrb[0].mxu0
        %597 = vmatprep.mubr.bf16.mxu0 0
        %598 = vmatmul.mubr.bf16.gmra.mrb[0].mxu0 %v514
        %v599 = vpop.f32.mrb[0].mxu0
        %v600 = vadd.f32 %v376, %v599
        %v601 = vpop.f32.mrb[0].mxu0
        %v602 = vpop.f32.mrb[0].mxu0
        %v603 = vadd.f32 %v377, %v602
        %v604 = vpop.f32.mrb[0].mxu0
        %605 = vmatprep.mubr.bf16.mxu0 0
        %606 = vmatmul.mubr.bf16.gmra.mrb[0].mxu0 %v515
        %v607 = vpop.f32.mrb[0].mxu0
        %v608 = vadd.f32 %v378, %v607
        %v609 = vpop.f32.mrb[0].mxu0
        %v610 = vpop.f32.mrb[0].mxu0
        %v611 = vadd.f32 %v379, %v610
        %v612 = vpop.f32.mrb[0].mxu0
        %613 = vmatprep.mubr.bf16.mxu0 0
        %614 = vmatmul.mubr.bf16.gmra.mrb[0].mxu0 %v516
        %v615 = vpop.f32.mrb[0].mxu0
        %v616 = vadd.f32 %v380, %v615
        %v617 = vpop.f32.mrb[0].mxu0
        %v618 = vpop.f32.mrb[0].mxu0
        %v619 = vadd.f32 %v381, %v618
        %v620 = vpop.f32.mrb[0].mxu0
        %621 = vdwg.mxu0
        %v622 = vmax.f32 %v560, 0.0
        %v623 = vmax.f32 %v563, 0.0
        %v624 = vmax.f32 %v568, 0.0
        %v625 = vmax.f32 %v571, 0.0
        %v626 = vmax.f32 %v576, 0.0
        %v627 = vmax.f32 %v579, 0.0
        %v628 = vmax.f32 %v584, 0.0
        %v629 = vmax.f32 %v587, 0.0
        %v630 = vmax.f32 %v592, 0.0
        %v631 = vmax.f32 %v595, 0.0
        %v632 = vmax.f32 %v600, 0.0
        %v633 = vmax.f32 %v603, 0.0
        %v634 = vmax.f32 %v608, 0.0
        %v635 = vmax.f32 %v611, 0.0
        %v636 = vmax.f32 %v616, 0.0
        %v637 = vmax.f32 %v619, 0.0
        %v638 = vpack.c.bf16 %v623, %v622
        %v639 = vpack.c.bf16 %v625, %v624
        %v640 = vpack.c.bf16 %v627, %v626
        %v641 = vpack.c.bf16 %v629, %v628
        %v642 = vpack.c.bf16 %v631, %v630
        %v643 = vpack.c.bf16 %v633, %v632
        %v644 = vpack.c.bf16 %v635, %v634
        %v645 = vpack.c.bf16 %v637, %v636
        %v646 = vld [vmem:[%s6] sm:$0x1]
        %647 = vmatprep.subr.bf16.mxu0 0
        %648 = vmatpush1.bf16.msra.mxu0 %v638
        %649 = vmatprep.subr.bf16.mxu0 0
        %650 = vmatpush1.bf16.msra.mxu0 %v639
        %651 = vmatprep.subr.bf16.mxu0 0
        %652 = vmatpush1.bf16.msra.mxu0 %v640
        %653 = vmatprep.subr.bf16.mxu0 0
        %654 = vmatpush1.bf16.msra.mxu0 %v641
        %655 = vmatprep.subr.bf16.mxu0 0
        %656 = vmatpush1.bf16.msra.mxu0 %v642
        %657 = vmatprep.subr.bf16.mxu0 0
        %658 = vmatpush1.bf16.msra.mxu0 %v643
        %659 = vmatprep.subr.bf16.mxu0 0
        %660 = vmatpush1.bf16.msra.mxu0 %v644
        %661 = vmatprep.subr.bf16.mxu0 0
        %662 = vmatpush1.bf16.msra.mxu0 %v645
        %663 = vmatprep.subr.bf16.mxu0 0
        %664 = vmatpush1.bf16.msra.mxu0 0
        %665 = vmatprep.subr.bf16.mxu0 0
        %666 = vmatpush1.bf16.msra.mxu0 0
        %667 = vmatprep.subr.bf16.mxu0 0
        %668 = vmatpush1.bf16.msra.mxu0 0
        %669 = vmatprep.subr.bf16.mxu0 0
        %670 = vmatpush1.bf16.msra.mxu0 0
        %671 = vmatprep.subr.bf16.mxu0 0
        %672 = vmatpush1.bf16.msra.mxu0 0
        %673 = vmatprep.subr.bf16.mxu0 0
        %674 = vmatpush1.bf16.msra.mxu0 0
        %675 = vmatprep.subr.bf16.mxu0 0
        %676 = vmatpush1.bf16.msra.mxu0 0
        %677 = vmatprep.subr.bf16.mxu0 0
        %678 = vmatpush1.bf16.msra.mxu0 0
        %679 = vmatprep.mubr.bf16.mxu0 0
        %680 = vmatmul.mubr.bf16.gmra.mrb[0].mxu0 %v365
        %v681 = vpop.f32.mrb[0].mxu0
        %v682 = vadd.f32 %v646, %v681
        %v683 = vpop.f32.mrb[0].mxu0
        %v684 = vpop.f32.mrb[0].mxu0
        %v685 = vpop.f32.mrb[0].mxu0
        %686 = vdwg.mxu0
        %687 = vst [vmem:[%s347] sm:$0x1] %v682
        %s688 = sand.u32 %s186, 1
        %s689 = scalar_lea.sflag [#allocation4], %s688
        %s690 = sand.u32 %s186, 1
        %s691 = scalar_lea.vmem [#allocation11], %s690
        // Predicated region
        $region69: #{tpu_custom_call.1} parent=47 // pred_check
          %p692 = pneg %p196
        $region70: #{tpu_custom_call.1} parent=47 // pred_check_branch
          %694 = sbr.rel (%p692) target = $region72
        $region71: #{tpu_custom_call.1} parent=47 // pred_region
          %s696 = ssub.s32 16, 16
          %697 = vsyncadd %s689, %s696
          %s698 = smul.addr %s26, 16
          %s699 = scalar_lea.hbm %s7, %s698
          %s701 = sshll.u32 %s691, 4
          %s702 = int_to_ptr.vmem [resolvable:$true] %s701
          %704 = dma.vmem_to_hbm [thread:$0]  %s702, 16, %s699, %s689
        $region72: #{tpu_custom_call.1} parent=47 // pred_fallthru
          _
      $region48: #{tpu_custom_call.1} parent=5 // pred_fallthru
        _
      %p705 = scmp.le.s32.totalorder 2, %s21
      // Predicated region
      $region73: #{tpu_custom_call.1} parent=5 // pred_check
        %p706 = pneg %p705
      $region74: #{tpu_custom_call.1} parent=5 // pred_check_branch
        %708 = sbr.rel (%p706) target = $region76
      $region75: #{tpu_custom_call.1} parent=5 // pred_region
        %s709 = ssub.s32 %s21, 2
        // Predicated region
        $region77: #{tpu_custom_call.1} parent=75 // pred_check
          %p710 = pneg %p202
        $region78: #{tpu_custom_call.1} parent=75 // pred_check_branch
          %712 = sbr.rel (%p710) target = $region80
        $region79: #{tpu_custom_call.1} parent=75 // pred_region
          %s713 = sand.u32 %s187, 1
          %s714 = scalar_lea.sflag [#allocation4], %s713
          %s715 = sand.u32 %s187, 1
          %s716 = scalar_lea.vmem [#allocation11], %s715
          %717 = dma.done %s714, 16
        $region80: #{tpu_custom_call.1} parent=75 // pred_fallthru
          _
      $region76: #{tpu_custom_call.1} parent=5 // pred_fallthru
        _
    $region6: #{tpu_custom_call.1} parent=1 // loop_footer
      %s25 = sadd.s32 1, %s21
    $region7: #{tpu_custom_call.1} parent=1 // loop_footer_branch
      %20 = sbr.rel target = $region3
    $region8: #{tpu_custom_call.1} parent=1 // loop_exit
      _
    %718 = vsyncpa [#allocation3], 1
    %s719 = scalar_lea.sflag [#allocation3], 1
    %720 = vsyncpa %s719, 1
    %721 = vsyncpa [#allocation6], 1
    %722 = vsyncpa [#allocation9], 1
    %723 = vsyncpa [#allocation4], 1
    %s724 = scalar_lea.sflag [#allocation4], 1
    %725 = vsyncpa %s724, 1

</llo_original>
